<compile_context>
chip_gen: v5e
topology: v5e:2x2
jax: 0.10.0
libtpu: 0.0.40
codegen_flags: <defaults>
</compile_context>

<pallas_src>
import functools
import math

import jax
import jax.numpy as jnp
from jax.experimental import pallas as pl
from jax.experimental.pallas import tpu as pltpu


def _round_up(x, m):
    return (x + m - 1) // m * m


def actor_net_kernel(x_ref, w1_ref, w2_ref, wh_ref, out_ref, *, action_size):
    """One batch-block of the ActorNet forward.

    Packing convention (see init_actor_params):
      x_ref  : (tb, K1)  bf16, column `state_size` is all ones, rest of the
               padding is zero.
      w1_ref : (K1, 128) bf16, bias in row `state_size`, plus a constant-1
               column so downstream layers see a ones column too.
      w2_ref : (128, 128) bf16, same trick.
      wh_ref : (128, 128) bf16, fused [w_mu | w_sigma_logits] in the first
               2*action_size lanes (bias row included), zeros elsewhere.
    """
    cdt = w1_ref.dtype  # MXU input dtype (bf16); accumulation stays f32.

    # fc1 + relu  (bias folded into the matmul via the ones column of x)
    h1 = jnp.maximum(
        jnp.dot(x_ref[...], w1_ref[...], preferred_element_type=jnp.float32),
        0.0)

    # fc2 + relu  (bias folded via the constant-1 column of h1)
    h2 = jnp.maximum(
        jnp.dot(h1.astype(cdt), w2_ref[...],
                preferred_element_type=jnp.float32),
        0.0)

    # fused heads: [mu_pre | sigma_logits | 0-pad] in one lane-dense matmul
    head = jnp.dot(h2.astype(cdt), wh_ref[...],
                   preferred_element_type=jnp.float32)

    # tanh only on the first `action_size` lanes (mu); sigma_logits stay
    # linear; padded lanes are zeros either way.
    lane = jax.lax.broadcasted_iota(jnp.int32, head.shape, 1)
    out_ref[...] = jnp.where(lane < action_size, jnp.tanh(head), head)


def actor_net_forward(x, packed_params, action_size, *, max_block=4096):
    """Runs the fused ActorNet kernel.  Returns (mu, sigma_logits) in f32."""
    w1_p, w2_p, wh_p = packed_params
    batch, state_size = x.shape
    k1, n1 = w1_p.shape
    n2 = w2_p.shape[1]
    nh = wh_p.shape[1]

    # ---- batch tiling -----------------------------------------------------
    # One fat block when possible (per-grid-step overhead dominates at these
    # sizes).  For very large batches, split into an EVEN number of blocks so
    # v7x's two TensorCores both get work on the "parallel" axis.
    if batch <= max_block:
        num_blocks = 1
        tb = _round_up(batch, 8)
    else:
        num_blocks = pl.cdiv(batch, max_block)
        if num_blocks % 2:
            num_blocks += 1
        tb = _round_up(pl.cdiv(batch, num_blocks), 8)
    bp = tb * num_blocks  # padded batch; all grid blocks are full.

    # ---- build the augmented activation matrix (bf16, ones column) --------
    x_aug = jnp.zeros((bp, k1), jnp.bfloat16)
    x_aug = x_aug.at[:batch, :state_size].set(x.astype(jnp.bfloat16))
    x_aug = x_aug.at[:, state_size].set(jnp.bfloat16(1.0))

    kernel = functools.partial(actor_net_kernel, action_size=action_size)

    flops = 2 * bp * (k1 * n1 + n1 * n2 + n2 * nh)
    bytes_accessed = int(
        x_aug.size * x_aug.dtype.itemsize
        + sum(w.size * w.dtype.itemsize for w in packed_params)
        + bp * nh * 4)

    out = pl.pallas_call(
        kernel,
        out_shape=jax.ShapeDtypeStruct((bp, nh), jnp.float32),
        grid_spec=pltpu.PrefetchScalarGridSpec(
            num_scalar_prefetch=0,
            grid=(num_blocks,),
            in_specs=[
                # activations stream over the batch grid axis (lane-dense).
                pl.BlockSpec((tb, k1), lambda i: (i, 0)),
                # weights stay VMEM-resident: constant block index => the
                # pipeline only DMAs them once, never re-fetches.
                pl.BlockSpec(w1_p.shape, lambda i: (0, 0)),
                pl.BlockSpec(w2_p.shape, lambda i: (0, 0)),
                pl.BlockSpec(wh_p.shape, lambda i: (0, 0)),
            ],
            out_specs=pl.BlockSpec((tb, nh), lambda i: (i, 0)),
        ),
        compiler_params=pltpu.CompilerParams(
            dimension_semantics=("parallel",),
        ),
        cost_estimate=pl.CostEstimate(
            flops=flops,
            transcendentals=bp * nh,
            bytes_accessed=bytes_accessed,
        ),
    )(x_aug, w1_p, w2_p, wh_p)

    mu = out[:batch, :action_size]
    sigma_logits = out[:batch, action_size:2 * action_size]
    return mu, sigma_logits


def init_actor_params(key, state_size, action_size, hidden_size,
                      weight_dtype=jnp.bfloat16):
    """Deterministic init mimicking torch.nn.Linear default
    (U[-1/sqrt(fan_in), 1/sqrt(fan_in)]), with mu / sigma_logits weights
    scaled by 0.01 as in the PyTorch __init__.

    Packed / padded for the kernel (all lane dims padded to 128, K dims to a
    multiple of 16 for bf16 sublane packing):
      w1_p : [K1, 128]  rows 0..S-1 = W1, row S = b1, and [S, 2H] = 1.0 so
                        h1 carries a constant-1 column after relu.
      w2_p : [128, 128] rows 0..2H-1 = W2, row 2H = b2, [2H, H] = 1.0.
      wh_p : [128, 128] rows 0..H-1 = [W_mu | W_sigma], row H = [b_mu | b_sig].
    """
    two_h, hid = 2 * hidden_size, hidden_size

    def linear(k, fan_in, fan_out, scale=1.0):
        kw, kb = jax.random.split(k)
        bound = 1.0 / math.sqrt(fan_in)
        w = jax.random.uniform(kw, (fan_in, fan_out), jnp.float32, -bound, bound)
        b = jax.random.uniform(kb, (fan_out,), jnp.float32, -bound, bound)
        return w * scale, b

    k1, k2, k3, k4 = jax.random.split(key, 4)
    w1, b1 = linear(k1, state_size, two_h)
    w2, b2 = linear(k2, two_h, hid)
    wmu, bmu = linear(k3, hid, action_size, scale=0.01)   # weight.mul_(0.01)
    wsl, bsl = linear(k4, hid, action_size, scale=0.01)   # weight.mul_(0.01)

    K1 = _round_up(state_size + 1, 16)    # augmented-x width (ones col at S)
    N1 = _round_up(two_h + 1, 128)        # h1 width (const-1 col at 2H)
    N2 = _round_up(hid + 1, 128)          # h2 width (const-1 col at H)
    NH = _round_up(2 * action_size, 128)  # lane-dense head width

    w1_p = jnp.zeros((K1, N1), jnp.float32)
    w1_p = w1_p.at[:state_size, :two_h].set(w1)
    w1_p = w1_p.at[state_size, :two_h].set(b1)     # bias row (hit by ones col)
    w1_p = w1_p.at[state_size, two_h].set(1.0)     # propagate constant-1 col

    w2_p = jnp.zeros((N1, N2), jnp.float32)
    w2_p = w2_p.at[:two_h, :hid].set(w2)
    w2_p = w2_p.at[two_h, :hid].set(b2)
    w2_p = w2_p.at[two_h, hid].set(1.0)

    wh_p = jnp.zeros((N2, NH), jnp.float32)
    wh_p = wh_p.at[:hid, :action_size].set(wmu)
    wh_p = wh_p.at[:hid, action_size:2 * action_size].set(wsl)
    wh_p = wh_p.at[hid, :action_size].set(bmu)
    wh_p = wh_p.at[hid, action_size:2 * action_size].set(bsl)

    return (w1_p.astype(weight_dtype),
            w2_p.astype(weight_dtype),
            wh_p.astype(weight_dtype))


def actor_net_ref(x, packed_params, state_size, action_size, hidden_size):
    """Pure-JAX f32 reference using the same (bf16-rounded) packed weights."""
    w1_p, w2_p, wh_p = (p.astype(jnp.float32) for p in packed_params)
    two_h, hid = 2 * hidden_size, hidden_size
    w1, b1 = w1_p[:state_size, :two_h], w1_p[state_size, :two_h]
    w2, b2 = w2_p[:two_h, :hid], w2_p[two_h, :hid]
    wmu, bmu = wh_p[:hid, :action_size], wh_p[hid, :action_size]
    wsl = wh_p[:hid, action_size:2 * action_size]
    bsl = wh_p[hid, action_size:2 * action_size]
    h1 = jnp.maximum(x @ w1 + b1, 0.0)
    h2 = jnp.maximum(h1 @ w2 + b2, 0.0)
    return jnp.tanh(h2 @ wmu + bmu), h2 @ wsl + bsl


if __name__ == "__main__":
    state_size, action_size, hidden_size = 16, 4, 32
    batch = 16

    key = jax.random.PRNGKey(0)
    kx, kp = jax.random.split(key)
    x = jax.random.normal(kx, (batch, state_size), jnp.float32)
    params = init_actor_params(kp, state_size, action_size, hidden_size)

    mu, sigma_logits = jax.block_until_ready(
        actor_net_forward(x, params, action_size)
    )

    mu_ref, sl_ref = actor_net_ref(x, params, state_size, action_size,
                                   hidden_size)
    assert mu.shape == (batch, action_size)
    assert sigma_logits.shape == (batch, action_size)
    # bf16 matmul inputs / bf16 activations with f32 accumulation vs f32 ref.
    assert jnp.allclose(mu, mu_ref, atol=2e-3, rtol=2e-2), \
        float(jnp.max(jnp.abs(mu - mu_ref)))
    assert jnp.allclose(sigma_logits, sl_ref, atol=2e-3, rtol=2e-2), \
        float(jnp.max(jnp.abs(sigma_logits - sl_ref)))

    print("KERNEL_OK")
</pallas_src>

<mosaic_0001>
module attributes {stable_mosaic.version = 11 : i64} {
  func.func @actor_net_kernel(%arg0: i32, %arg1: memref<16x32xbf16, #tpu.memory_space<vmem>>, %arg2: memref<32x128xbf16, #tpu.memory_space<vmem>>, %arg3: memref<128x128xbf16, #tpu.memory_space<vmem>>, %arg4: memref<128x128xbf16, #tpu.memory_space<vmem>>, %arg5: memref<16x128xf32, #tpu.memory_space<vmem>>) attributes {dimension_semantics = [#tpu.dimension_semantics<parallel>], iteration_bounds = array<i64: 1>, scalar_prefetch = 0 : i64, scratch_operands = 0 : i64, tpu.core_type = #tpu.core_type<tc>, window_params = [{transform_indices = @transform_0, window_bounds = array<i64: 16, 32>}, {pipeline_mode = #tpu.pipeline_mode<synchronous>, transform_indices = @transform_1, window_bounds = array<i64: 32, 128>}, {pipeline_mode = #tpu.pipeline_mode<synchronous>, transform_indices = @transform_2, window_bounds = array<i64: 128, 128>}, {pipeline_mode = #tpu.pipeline_mode<synchronous>, transform_indices = @transform_3, window_bounds = array<i64: 128, 128>}, {transform_indices = @transform_4, window_bounds = array<i64: 16, 128>}]} {
    %c0 = arith.constant 0 : index
    %c0_0 = arith.constant 0 : index
    %0 = vector.load %arg1[%c0, %c0_0] : memref<16x32xbf16, #tpu.memory_space<vmem>>, vector<16x32xbf16>
    %c0_1 = arith.constant 0 : index
    %c0_2 = arith.constant 0 : index
    %1 = vector.load %arg2[%c0_1, %c0_2] : memref<32x128xbf16, #tpu.memory_space<vmem>>, vector<32x128xbf16>
    %cst = arith.constant dense<0.000000e+00> : vector<16x128xf32>
    %2 = tpu.matmul %0, %1, %cst {dimension_numbers = #tpu.dot_dimension_numbers<[1], [0], [0], [1], [0, 0, 1, 1], [], []>} : vector<16x32xbf16>, vector<32x128xbf16>, vector<16x128xf32> -> vector<16x128xf32>
    %cst_3 = arith.constant 0.000000e+00 : f32
    %3 = vector.broadcast %cst_3 : f32 to vector<16x128xf32>
    %4 = arith.maximumf %2, %3 : vector<16x128xf32>
    %5 = arith.truncf %4 : vector<16x128xf32> to vector<16x128xbf16>
    %c0_4 = arith.constant 0 : index
    %c0_5 = arith.constant 0 : index
    %6 = vector.load %arg3[%c0_4, %c0_5] : memref<128x128xbf16, #tpu.memory_space<vmem>>, vector<128x128xbf16>
    %cst_6 = arith.constant dense<0.000000e+00> : vector<16x128xf32>
    %7 = tpu.matmul %5, %6, %cst_6 {dimension_numbers = #tpu.dot_dimension_numbers<[1], [0], [0], [1], [0, 0, 1, 1], [], []>} : vector<16x128xbf16>, vector<128x128xbf16>, vector<16x128xf32> -> vector<16x128xf32>
    %cst_7 = arith.constant 0.000000e+00 : f32
    %8 = vector.broadcast %cst_7 : f32 to vector<16x128xf32>
    %9 = arith.maximumf %7, %8 : vector<16x128xf32>
    %10 = arith.truncf %9 : vector<16x128xf32> to vector<16x128xbf16>
    %c0_8 = arith.constant 0 : index
    %c0_9 = arith.constant 0 : index
    %11 = vector.load %arg4[%c0_8, %c0_9] : memref<128x128xbf16, #tpu.memory_space<vmem>>, vector<128x128xbf16>
    %cst_10 = arith.constant dense<0.000000e+00> : vector<16x128xf32>
    %12 = tpu.matmul %10, %11, %cst_10 {dimension_numbers = #tpu.dot_dimension_numbers<[1], [0], [0], [1], [0, 0, 1, 1], [], []>} : vector<16x128xbf16>, vector<128x128xbf16>, vector<16x128xf32> -> vector<16x128xf32>
    %13 = tpu.iota {dimensions = array<i32: 1>} : vector<16x128xi32>
    %c4_i32 = arith.constant 4 : i32
    %14 = vector.broadcast %c4_i32 : i32 to vector<16x128xi32>
    %15 = arith.cmpi slt, %13, %14 : vector<16x128xi32>
    %16 = math.tanh %12 : vector<16x128xf32>
    %17 = arith.select %15, %16, %12 : vector<16x128xi1>, vector<16x128xf32>
    %c0_11 = arith.constant 0 : index
    %c0_12 = arith.constant 0 : index
    %18 = vector.load %arg5[%c0_11, %c0_12] : memref<16x128xf32, #tpu.memory_space<vmem>>, vector<16x128xf32>
    tpu.vector_store %arg5[%c0_11, %c0_12], %17 {strides = array<i32>} : memref<16x128xf32, #tpu.memory_space<vmem>>, vector<16x128xf32>,
    return
  }
  func.func @transform_0(%arg0: i32) -> (i32, i32) {
    %c0_i32 = arith.constant 0 : i32
    %c0_i32_0 = arith.constant 0 : i32
    return %arg0, %c0_i32 : i32, i32
  }
  func.func @transform_1(%arg0: i32) -> (i32, i32) {
    %c0_i32 = arith.constant 0 : i32
    %c0_i32_0 = arith.constant 0 : i32
    %c0_i32_1 = arith.constant 0 : i32
    return %c0_i32, %c0_i32_0 : i32, i32
  }
  func.func @transform_2(%arg0: i32) -> (i32, i32) {
    %c0_i32 = arith.constant 0 : i32
    %c0_i32_0 = arith.constant 0 : i32
    %c0_i32_1 = arith.constant 0 : i32
    return %c0_i32, %c0_i32_0 : i32, i32
  }
  func.func @transform_3(%arg0: i32) -> (i32, i32) {
    %c0_i32 = arith.constant 0 : i32
    %c0_i32_0 = arith.constant 0 : i32
    %c0_i32_1 = arith.constant 0 : i32
    return %c0_i32, %c0_i32_0 : i32, i32
  }
  func.func @transform_4(%arg0: i32) -> (i32, i32) {
    %c0_i32 = arith.constant 0 : i32
    %c0_i32_0 = arith.constant 0 : i32
    return %arg0, %c0_i32 : i32, i32
  }
}

</mosaic_0001>

<llo_original>
// kernel: tpu_custom_call.1
$region0: #{tpu_custom_call.1}
  #allocation0 [shape = 'u32[]', space=smem, size = 0x4, offset = 0x4, fixed_abs, tag = 'smem constant byte address 0x4 - core index']
  #allocation1 [shape = 'u32[72,128]{1,0:T(1,128)}', space=vmem, size = 0x9000, scoped, tag = 'internal scratch']
  %s0 = inlined_call_operand.hbm [shape: bf16[16,32], index: 0, kind: input, shape index: {}]
  %s1 = inlined_call_operand.hbm [shape: bf16[32,128], index: 1, kind: input, shape index: {}]
  %s2 = inlined_call_operand.hbm [shape: bf16[128,128], index: 2, kind: input, shape index: {}]
  %s3 = inlined_call_operand.hbm [shape: bf16[128,128], index: 3, kind: input, shape index: {}]
  %s4 = inlined_call_operand.hbm [shape: f32[16,128], index: 4, kind: output, shape index: {}]
  %s5 = sld [smem:[#allocation0]]
  $region42: #{tpu_custom_call.1} parent=0
    _
  %s7 = ssub.s32 1, %s5
  %s8 = scalar_select 0, %s7, %s5
  $region1: #{tpu_custom_call.1} parent=0
    #allocation2 [shape = 'u8[4096]{0}', space=vmem, size = 0x1000, scoped, tag = 'input window, operand 0, single buffered']
    #allocation3 [shape = 's32[1]{0}', space=sflag, size = 0x4, scoped, tag = 'scoped memory for tpu_custom_call.1']
    #allocation4 [shape = 's32[1]{0}', space=sflag, size = 0x4, scoped, tag = 'scoped memory for tpu_custom_call.1']
    #allocation5 [shape = 'u8[8192]{0}', space=vmem, size = 0x2000, scoped, tag = 'input window, operand 1, single buffered']
    #allocation6 [shape = 's32[1]{0}', space=sflag, size = 0x4, scoped, tag = 'scoped memory for tpu_custom_call.1']
    #allocation7 [shape = 'u8[32768]{0}', space=vmem, size = 0x8000, scoped, tag = 'input window, operand 2, single buffered']
    #allocation8 [shape = 'u8[32768]{0}', space=vmem, size = 0x8000, scoped, tag = 'input window, operand 3, single buffered']
    #allocation9 [shape = 's32[1]{0}', space=sflag, size = 0x4, scoped, tag = 'scoped memory for tpu_custom_call.1']
    #allocation10 [shape = 'u8[8192]{0}', space=vmem, size = 0x2000, scoped, tag = 'output window, operand 0, single buffered']
    %9 = vsyncpa [#allocation3], 0
    %10 = vsyncpa [#allocation6], 0
    %11 = vsyncpa [#allocation9], 0
    %12 = vsyncpa [#allocation4], 0
    // Predicated region
    $region2: #{tpu_custom_call.1} parent=1 // pred_check
      _
    $region3: #{tpu_custom_call.1} parent=1 // pred_check_branch
      %14 = sbr.rel (0) target = $region5
    $region4: #{tpu_custom_call.1} parent=1 // pred_region
      %16 = vsyncadd [#allocation3], 0
      %s17 = sshll.u32 %s0, 4
      %s18 = int_to_ptr.hbm [resolvable:$true] %s17
      %s19 = sshll.u32 [#allocation2], 4
      %s20 = int_to_ptr.vmem [resolvable:$true] %s19
      %25 = dma.hbm_to_vmem [thread:$0]  %s18, 128, %s20, [#allocation3], 64, 64, 4
    $region5: #{tpu_custom_call.1} parent=1 // pred_fallthru
      _
    // Predicated region
    $region6: #{tpu_custom_call.1} parent=1 // pred_check
      _
    $region7: #{tpu_custom_call.1} parent=1 // pred_check_branch
      %27 = sbr.rel (0) target = $region9
    $region8: #{tpu_custom_call.1} parent=1 // pred_region
      %29 = vsyncadd [#allocation6], 0
      %s30 = sshll.u32 %s1, 4
      %s31 = int_to_ptr.hbm [resolvable:$true] %s30
      %s32 = sshll.u32 [#allocation5], 4
      %s33 = int_to_ptr.vmem [resolvable:$true] %s32
      %38 = dma.hbm_to_vmem [thread:$0]  %s31, 256, %s33, [#allocation6], 64, 64, 4
    $region9: #{tpu_custom_call.1} parent=1 // pred_fallthru
      _
    // Predicated region
    $region10: #{tpu_custom_call.1} parent=1 // pred_check
      _
    $region11: #{tpu_custom_call.1} parent=1 // pred_check_branch
      %40 = sbr.rel (0) target = $region13
    $region12: #{tpu_custom_call.1} parent=1 // pred_region
      %42 = vsyncadd [#allocation6], 0
      %s43 = sshll.u32 %s2, 4
      %s44 = int_to_ptr.hbm [resolvable:$true] %s43
      %s45 = sshll.u32 [#allocation7], 4
      %s46 = int_to_ptr.vmem [resolvable:$true] %s45
      %51 = dma.hbm_to_vmem [thread:$0]  %s44, 1024, %s46, [#allocation6], 64, 64, 4
    $region13: #{tpu_custom_call.1} parent=1 // pred_fallthru
      _
    // Predicated region
    $region14: #{tpu_custom_call.1} parent=1 // pred_check
      _
    $region15: #{tpu_custom_call.1} parent=1 // pred_check_branch
      %53 = sbr.rel (0) target = $region17
    $region16: #{tpu_custom_call.1} parent=1 // pred_region
      %55 = vsyncadd [#allocation9], 0
      %s56 = sshll.u32 %s3, 4
      %s57 = int_to_ptr.hbm [resolvable:$true] %s56
      %s58 = sshll.u32 [#allocation8], 4
      %s59 = int_to_ptr.vmem [resolvable:$true] %s58
      %64 = dma.hbm_to_vmem [thread:$0]  %s57, 1024, %s59, [#allocation9], 64, 64, 4
    $region17: #{tpu_custom_call.1} parent=1 // pred_fallthru
      _
    // Predicated region
    $region18: #{tpu_custom_call.1} parent=1 // pred_check
      _
    $region19: #{tpu_custom_call.1} parent=1 // pred_check_branch
      %66 = sbr.rel (0) target = $region21
    $region20: #{tpu_custom_call.1} parent=1 // pred_region
      %68 = dma.done [#allocation3], 128
    $region21: #{tpu_custom_call.1} parent=1 // pred_fallthru
      _
    // Predicated region
    $region22: #{tpu_custom_call.1} parent=1 // pred_check
      _
    $region23: #{tpu_custom_call.1} parent=1 // pred_check_branch
      %70 = sbr.rel (0) target = $region25
    $region24: #{tpu_custom_call.1} parent=1 // pred_region
      %72 = dma.done [#allocation6], 256
    $region25: #{tpu_custom_call.1} parent=1 // pred_fallthru
      _
    // Predicated region
    $region26: #{tpu_custom_call.1} parent=1 // pred_check
      _
    $region27: #{tpu_custom_call.1} parent=1 // pred_check_branch
      %74 = sbr.rel (0) target = $region29
    $region28: #{tpu_custom_call.1} parent=1 // pred_region
      %76 = dma.done [#allocation6], 1024
    $region29: #{tpu_custom_call.1} parent=1 // pred_fallthru
      _
    // Predicated region
    $region30: #{tpu_custom_call.1} parent=1 // pred_check
      _
    $region31: #{tpu_custom_call.1} parent=1 // pred_check_branch
      %78 = sbr.rel (0) target = $region33
    $region32: #{tpu_custom_call.1} parent=1 // pred_region
      %80 = dma.done [#allocation9], 1024
    $region33: #{tpu_custom_call.1} parent=1 // pred_fallthru
      _
    %v82 = vld [vmem:[#allocation2] sm:$0xf]
    %v83 = vld [vmem:[#allocation2 + $0x4] sm:$0xf]
    %v84 = vld [vmem:[#allocation5] sm:$0xf]
    %v85 = vld [vmem:[#allocation5 + $0x4] sm:$0xf]
    %v86 = vld [vmem:[#allocation5 + $0x8] sm:$0xf]
    %v87 = vld [vmem:[#allocation5 + $0xc] sm:$0xf]
    %v90 = vunpack.c.l.b16 %v82
    %v91 = vunpack.c.l.b16 %v83
    %v92 = vpack.c.b16 %v91, %v90
    %v97 = vunpack.c.l.b16 %v84
    %v98 = vunpack.c.l.b16 %v85
    %v99 = vunpack.c.l.b16 %v86
    %v100 = vunpack.c.l.b16 %v87
    %v101 = vpack.c.b16 %v98, %v97
    %v102 = vpack.c.b16 %v100, %v99
    %vm105 = vcmask 261120
    %v107 = vsel %vm105, %v92, 0
    %109 = vmatpush.bf16.msra.mxu0 0
    %110 = vmatpush.bf16.msra.mxu0 0
    %111 = vmatpush.bf16.msra.mxu0 0
    %112 = vmatpush.bf16.msra.mxu0 0
    %113 = vmatpush.bf16.msra.mxu0 0
    %114 = vmatpush.bf16.msra.mxu0 0
    %115 = vmatpush.bf16.msra.mxu0 %v102
    %116 = vmatpush.bf16.msra.mxu0 %v101
    %117 = vmatmul.bf16.gmra.mxu0 %v107
    %v118 = vpop.f32.mrf.mxu0
    %v119 = vadd.f32 0.0, %v118
    %v120 = vpop.f32.mrf.mxu0
    %v121 = vadd.f32 0.0, %v120
    %122 = vdwg.mxu0
    %v123 = vmax.f32 %v119, 0.0
    %v124 = vmax.f32 %v121, 0.0
    %v125 = vpack.c.bf16 %v124, %v123
    %v126 = vld [vmem:[#allocation7] sm:$0xf]
    %v127 = vld [vmem:[#allocation7 + $0x4] sm:$0xf]
    %v128 = vld [vmem:[#allocation7 + $0x8] sm:$0xf]
    %v129 = vld [vmem:[#allocation7 + $0xc] sm:$0xf]
    %v130 = vld [vmem:[#allocation7 + $0x10] sm:$0xf]
    %v131 = vld [vmem:[#allocation7 + $0x14] sm:$0xf]
    %v132 = vld [vmem:[#allocation7 + $0x18] sm:$0xf]
    %v133 = vld [vmem:[#allocation7 + $0x1c] sm:$0xf]
    %v134 = vld [vmem:[#allocation7 + $0x20] sm:$0xf]
    %v135 = vld [vmem:[#allocation7 + $0x24] sm:$0xf]
    %v136 = vld [vmem:[#allocation7 + $0x28] sm:$0xf]
    %v137 = vld [vmem:[#allocation7 + $0x2c] sm:$0xf]
    %v138 = vld [vmem:[#allocation7 + $0x30] sm:$0xf]
    %v139 = vld [vmem:[#allocation7 + $0x34] sm:$0xf]
    %v140 = vld [vmem:[#allocation7 + $0x38] sm:$0xf]
    %v141 = vld [vmem:[#allocation7 + $0x3c] sm:$0xf]
    %v158 = vunpack.c.l.b16 %v126
    %v159 = vunpack.c.l.b16 %v127
    %v160 = vunpack.c.l.b16 %v128
    %v161 = vunpack.c.l.b16 %v129
    %v162 = vunpack.c.l.b16 %v130
    %v163 = vunpack.c.l.b16 %v131
    %v164 = vunpack.c.l.b16 %v132
    %v165 = vunpack.c.l.b16 %v133
    %v166 = vunpack.c.l.b16 %v134
    %v167 = vunpack.c.l.b16 %v135
    %v168 = vunpack.c.l.b16 %v136
    %v169 = vunpack.c.l.b16 %v137
    %v170 = vunpack.c.l.b16 %v138
    %v171 = vunpack.c.l.b16 %v139
    %v172 = vunpack.c.l.b16 %v140
    %v173 = vunpack.c.l.b16 %v141
    %v174 = vpack.c.b16 %v159, %v158
    %v175 = vpack.c.b16 %v161, %v160
    %v176 = vpack.c.b16 %v163, %v162
    %v177 = vpack.c.b16 %v165, %v164
    %v178 = vpack.c.b16 %v167, %v166
    %v179 = vpack.c.b16 %v169, %v168
    %v180 = vpack.c.b16 %v171, %v170
    %v181 = vpack.c.b16 %v173, %v172
    %190 = vmatpush.bf16.msra.mxu0 %v181
    %191 = vmatpush.bf16.msra.mxu0 %v180
    %192 = vmatpush.bf16.msra.mxu0 %v179
    %193 = vmatpush.bf16.msra.mxu0 %v178
    %194 = vmatpush.bf16.msra.mxu0 %v177
    %195 = vmatpush.bf16.msra.mxu0 %v176
    %196 = vmatpush.bf16.msra.mxu0 %v175
    %197 = vmatpush.bf16.msra.mxu0 %v174
    %198 = vmatmul.bf16.gmra.mxu0 %v125
    %v199 = vpop.f32.mrf.mxu0
    %v200 = vadd.f32 0.0, %v199
    %v201 = vpop.f32.mrf.mxu0
    %v202 = vadd.f32 0.0, %v201
    %203 = vdwg.mxu0
    %v204 = vmax.f32 %v200, 0.0
    %v205 = vmax.f32 %v202, 0.0
    %v206 = vpack.c.bf16 %v205, %v204
    %v207 = vld [vmem:[#allocation8] sm:$0xf]
    %v208 = vld [vmem:[#allocation8 + $0x4] sm:$0xf]
    %v209 = vld [vmem:[#allocation8 + $0x8] sm:$0xf]
    %v210 = vld [vmem:[#allocation8 + $0xc] sm:$0xf]
    %v211 = vld [vmem:[#allocation8 + $0x10] sm:$0xf]
    %v212 = vld [vmem:[#allocation8 + $0x14] sm:$0xf]
    %v213 = vld [vmem:[#allocation8 + $0x18] sm:$0xf]
    %v214 = vld [vmem:[#allocation8 + $0x1c] sm:$0xf]
    %v215 = vld [vmem:[#allocation8 + $0x20] sm:$0xf]
    %v216 = vld [vmem:[#allocation8 + $0x24] sm:$0xf]
    %v217 = vld [vmem:[#allocation8 + $0x28] sm:$0xf]
    %v218 = vld [vmem:[#allocation8 + $0x2c] sm:$0xf]
    %v219 = vld [vmem:[#allocation8 + $0x30] sm:$0xf]
    %v220 = vld [vmem:[#allocation8 + $0x34] sm:$0xf]
    %v221 = vld [vmem:[#allocation8 + $0x38] sm:$0xf]
    %v222 = vld [vmem:[#allocation8 + $0x3c] sm:$0xf]
    %v239 = vunpack.c.l.b16 %v207
    %v240 = vunpack.c.l.b16 %v208
    %v241 = vunpack.c.l.b16 %v209
    %v242 = vunpack.c.l.b16 %v210
    %v243 = vunpack.c.l.b16 %v211
    %v244 = vunpack.c.l.b16 %v212
    %v245 = vunpack.c.l.b16 %v213
    %v246 = vunpack.c.l.b16 %v214
    %v247 = vunpack.c.l.b16 %v215
    %v248 = vunpack.c.l.b16 %v216
    %v249 = vunpack.c.l.b16 %v217
    %v250 = vunpack.c.l.b16 %v218
    %v251 = vunpack.c.l.b16 %v219
    %v252 = vunpack.c.l.b16 %v220
    %v253 = vunpack.c.l.b16 %v221
    %v254 = vunpack.c.l.b16 %v222
    %v255 = vpack.c.b16 %v240, %v239
    %v256 = vpack.c.b16 %v242, %v241
    %v257 = vpack.c.b16 %v244, %v243
    %v258 = vpack.c.b16 %v246, %v245
    %v259 = vpack.c.b16 %v248, %v247
    %v260 = vpack.c.b16 %v250, %v249
    %v261 = vpack.c.b16 %v252, %v251
    %v262 = vpack.c.b16 %v254, %v253
    %271 = vmatpush.bf16.msra.mxu0 %v262
    %272 = vmatpush.bf16.msra.mxu0 %v261
    %273 = vmatpush.bf16.msra.mxu0 %v260
    %274 = vmatpush.bf16.msra.mxu0 %v259
    %275 = vmatpush.bf16.msra.mxu0 %v258
    %276 = vmatpush.bf16.msra.mxu0 %v257
    %277 = vmatpush.bf16.msra.mxu0 %v256
    %278 = vmatpush.bf16.msra.mxu0 %v255
    %279 = vmatmul.bf16.gmra.mxu0 %v206
    %v280 = vpop.f32.mrf.mxu0
    %v281 = vadd.f32 0.0, %v280
    %v282 = vpop.f32.mrf.mxu0
    %v283 = vadd.f32 0.0, %v282
    %284 = vdwg.mxu0
    %v285 = vlaneseq
    %v286 = vand.u32 %v285, 127
    %vm287 = vcmp.lt.s32.totalorder %v286, 4
    %v288 = vtanh.pop %v281
    %v289 = vtanh.pop %v283
    %v290 = vsel %vm287, %v288, %v281
    %v291 = vsel %vm287, %v289, %v283
    %292 = vst [vmem:[#allocation10] sm:$0xff] %v290
    %293 = vst [vmem:[#allocation10 + $0x8] sm:$0xff] %v291
    // Predicated region
    $region34: #{tpu_custom_call.1} parent=1 // pred_check
      _
    $region35: #{tpu_custom_call.1} parent=1 // pred_check_branch
      %295 = sbr.rel (0) target = $region37
    $region36: #{tpu_custom_call.1} parent=1 // pred_region
      %297 = vsyncadd [#allocation4], 0
      %s298 = sshll.u32 [#allocation10], 4
      %s299 = int_to_ptr.vmem [resolvable:$true] %s298
      %s300 = sshll.u32 %s4, 4
      %s301 = int_to_ptr.hbm [resolvable:$true] %s300
      %306 = dma.vmem_to_hbm [thread:$0]  %s299, 256, %s301, [#allocation4], 128, 128, 8
    $region37: #{tpu_custom_call.1} parent=1 // pred_fallthru
      _
    // Predicated region
    $region38: #{tpu_custom_call.1} parent=1 // pred_check
      _
    $region39: #{tpu_custom_call.1} parent=1 // pred_check_branch
      %308 = sbr.rel (0) target = $region41
    $region40: #{tpu_custom_call.1} parent=1 // pred_region
      %310 = dma.done [#allocation4], 256
    $region41: #{tpu_custom_call.1} parent=1 // pred_fallthru
      _
    %311 = vsyncpa [#allocation3], 1
    %312 = vsyncpa [#allocation6], 1
    %313 = vsyncpa [#allocation9], 1
    %314 = vsyncpa [#allocation4], 1

</llo_original>
